<compile_context>
chip_gen: v7x
topology: tpu7x:2x2x1
jax: 0.10.0
libtpu: 0.0.40
codegen_flags: <defaults>
</compile_context>

<pallas_src>
import jax
import jax.numpy as jnp
from jax.experimental import pallas as pl
from jax.experimental.pallas import tpu as pltpu

_LANE = 128
_SUBLANE = 8

# Per-generation row cap for one block of the (rows, 128) slab.
#   8192 rows * 128 * 4 B = 4 MiB per f32 buffer  -> 16 MiB double-buffered
#     in+out: fits v6e/v7x's 32 MiB scoped-VMEM default with headroom and
#     amortizes the ~0.35 us per-grid-step overhead to ~10% on v7x's fast HBM.
#   4096 rows * 128 * 4 B = 2 MiB per f32 buffer  ->  8 MiB double-buffered:
#     safe under v5e's 16 MiB scoped-VMEM default (and any unknown chip).
_BLOCK_ROWS_BIG = 8192
_BLOCK_ROWS_SAFE = 4096


def _round_up(x: int, m: int) -> int:
    return ((x + m - 1) // m) * m


def _max_block_rows() -> int:
    """Pick the per-block row cap from the device generation (trace-time)."""
    kind = ""
    try:
        kind = jax.devices()[0].device_kind.lower()
    except Exception:  # pragma: no cover - defensive; fall back to safe size
        pass
    if ("v6" in kind) or ("v7" in kind):
        return _BLOCK_ROWS_BIG
    # v5e/v5p/v4/... or unknown: stay under the 16 MiB scoped-VMEM default.
    return _BLOCK_ROWS_SAFE


def _choose_block_rows(rows: int, cap: int) -> int:
    """Block rows: big for roofline, but always >=2 grid blocks when rows>16
    so v7x's two TensorCores both get work (dimension_semantics='parallel')."""
    if rows <= 2 * _SUBLANE:
        # Tiny input: one full-extent block (legal even if rows % 8 != 0).
        return rows
    if rows <= cap:
        # Split into (at least) two blocks; block must be a multiple of 8.
        return _round_up((rows + 1) // 2, _SUBLANE)
    return cap


def _step_kernel(x_ref, o_ref):
    # Elementwise on the VPU: (x >= 0) cast to the output dtype
    # (float32 by default, matching PyTorch .float()).
    o_ref[...] = (x_ref[...] >= 0).astype(o_ref.dtype)


def step_pallas(x: jax.Array, *, out_dtype=jnp.float32,
                donate_input: bool = False) -> jax.Array:
    """Elementwise step: (x >= 0).astype(out_dtype), same shape as input.

    donate_input=True aliases the input HBM buffer as the output (only when
    dtypes match) -- a footprint win, opt-in because the caller must not
    reuse `x`.  out_dtype narrower than float32 deviates from the PyTorch
    contract (opt-in, cuts HBM bytes moved).
    """
    orig_shape = x.shape
    n = x.size
    out_dtype = jnp.dtype(out_dtype)

    if n == 0:
        return jnp.zeros(orig_shape, out_dtype)

    x_flat = jnp.reshape(x, (n,))
    rows = n // _LANE
    rem = n % _LANE

    if rows == 0:
        # < 128 elements: a kernel launch costs more than the op itself.
        return jnp.reshape((x_flat >= 0).astype(out_dtype), orig_shape)

    n_main = rows * _LANE
    # Ragged path: run the kernel on the 128-aligned prefix only; the <128
    # element tail is fixed up with plain XLA ops below (no full-tensor pad).
    x_main = jnp.reshape(x_flat[:n_main] if rem else x_flat, (rows, _LANE))

    cap = _max_block_rows()
    block_rows = _choose_block_rows(rows, cap)
    grid = (pl.cdiv(rows, block_rows),)

    in_bytes = n_main * jnp.dtype(x.dtype).itemsize
    out_bytes = n_main * out_dtype.itemsize
    # Explicit scoped-VMEM limit only needed when using the big (4 MiB) block.
    vmem_limit = 32 * 1024 * 1024 if block_rows > _BLOCK_ROWS_SAFE else None

    aliases = {}
    if donate_input and jnp.dtype(x.dtype) == out_dtype:
        aliases = {0: 0}

    out2d = pl.pallas_call(
        _step_kernel,
        out_shape=jax.ShapeDtypeStruct((rows, _LANE), out_dtype),
        grid_spec=pltpu.PrefetchScalarGridSpec(
            num_scalar_prefetch=0,
            grid=grid,
            in_specs=[pl.BlockSpec((block_rows, _LANE), lambda i: (i, 0))],
            out_specs=pl.BlockSpec((block_rows, _LANE), lambda i: (i, 0)),
        ),
        compiler_params=pltpu.CompilerParams(
            # Row axis is independent: lets v7x's two TensorCores each stream
            # half of the slab (near-zero effect on single-TC v5e/v6e).
            dimension_semantics=("parallel",),
            vmem_limit_bytes=vmem_limit,
        ),
        cost_estimate=pl.CostEstimate(
            flops=n_main,
            transcendentals=0,
            bytes_accessed=in_bytes + out_bytes,
        ),
        input_output_aliases=aliases,
    )(x_main)

    out_flat = jnp.reshape(out2d, (n_main,))
    if rem:
        # O(128) tail fix-up with plain XLA ops (tiny compare + concat).
        tail_out = (x_flat[n_main:] >= 0).astype(out_dtype)
        out_flat = jnp.concatenate([out_flat, tail_out])
    return jnp.reshape(out_flat, orig_shape)


if __name__ == "__main__":
    key = jax.random.PRNGKey(0)

    # Primary NCHW input consistent with a conv-style activation tensor.
    x = jax.random.normal(key, (2, 4, 16, 16), dtype=jnp.float32)
    out = step_pallas(x)
    jax.block_until_ready(out)
    ref = (x >= 0).astype(jnp.float32)
    assert out.shape == x.shape
    assert out.dtype == jnp.float32
    assert bool(jnp.all(out == ref))

    # Ragged shape (element count not a multiple of 128) exercises the
    # aligned-prefix kernel + O(128) tail fix-up path.
    key2 = jax.random.PRNGKey(1)
    y = jax.random.normal(key2, (3, 5, 7, 11), dtype=jnp.float32)
    out_y = step_pallas(y)
    jax.block_until_ready(out_y)
    ref_y = (y >= 0).astype(jnp.float32)
    assert out_y.shape == y.shape
    assert bool(jnp.all(out_y == ref_y))

    # Larger aligned shape exercises the multi-block (>=2 grid steps) path.
    key3 = jax.random.PRNGKey(2)
    z = jax.random.normal(key3, (8, 16, 32, 32), dtype=jnp.float32)
    out_z = step_pallas(z)
    jax.block_until_ready(out_z)
    ref_z = (z >= 0).astype(jnp.float32)
    assert out_z.shape == z.shape
    assert bool(jnp.all(out_z == ref_z))

    print("KERNEL_OK")
</pallas_src>

<mosaic_0001>
module attributes {stable_mosaic.version = 11 : i64} {
  func.func @_step_kernel(%arg0: i32, %arg1: memref<16x128xf32, #tpu.memory_space<vmem>>, %arg2: memref<16x128xf32, #tpu.memory_space<vmem>>) attributes {dimension_semantics = [#tpu.dimension_semantics<parallel>], iteration_bounds = array<i64: 1>, scalar_prefetch = 0 : i64, scratch_operands = 0 : i64, tpu.core_type = #tpu.core_type<tc>, window_params = [{transform_indices = @transform_0, window_bounds = array<i64: 16, 128>}, {transform_indices = @transform_1, window_bounds = array<i64: 16, 128>}]} {
    %c0 = arith.constant 0 : index
    %c0_0 = arith.constant 0 : index
    %0 = vector.load %arg1[%c0, %c0_0] : memref<16x128xf32, #tpu.memory_space<vmem>>, vector<16x128xf32>
    %cst = arith.constant 0.000000e+00 : f32
    %1 = vector.broadcast %cst : f32 to vector<16x128xf32>
    %2 = arith.cmpf oge, %0, %1 : vector<16x128xf32>
    %3 = arith.extui %2 : vector<16x128xi1> to vector<16x128xi32>
    %4 = arith.sitofp %3 : vector<16x128xi32> to vector<16x128xf32>
    %c0_1 = arith.constant 0 : index
    %c0_2 = arith.constant 0 : index
    %5 = vector.load %arg2[%c0_1, %c0_2] : memref<16x128xf32, #tpu.memory_space<vmem>>, vector<16x128xf32>
    tpu.vector_store %arg2[%c0_1, %c0_2], %4 {strides = array<i32>} : memref<16x128xf32, #tpu.memory_space<vmem>>, vector<16x128xf32>,
    return
  }
  func.func @transform_0(%arg0: i32) -> (i32, i32) {
    %c0_i32 = arith.constant 0 : i32
    %c0_i32_0 = arith.constant 0 : i32
    return %arg0, %c0_i32 : i32, i32
  }
  func.func @transform_1(%arg0: i32) -> (i32, i32) {
    %c0_i32 = arith.constant 0 : i32
    %c0_i32_0 = arith.constant 0 : i32
    return %arg0, %c0_i32 : i32, i32
  }
}

</mosaic_0001>

<llo_original>
// kernel: tpu_custom_call.1
$region0: #{tpu_custom_call.1}
  #allocation0 [shape = 'u32[]', space=smem, size = 0x4, offset = 0x4, fixed_abs, tag = 'smem constant byte address 0x4 - core index']
  #allocation1 [shape = 'u32[144,128]{1,0:T(1,128)}', space=vmem, size = 0x12000, scoped, tag = 'internal scratch']
  %s0 = inlined_call_operand.hbm [shape: f32[16,128], index: 0, kind: input, shape index: {}]
  %s1 = inlined_call_operand.hbm [shape: f32[16,128], index: 1, kind: output, shape index: {}]
  %s2 = sld [smem:[#allocation0]]
  $region18: #{tpu_custom_call.1} parent=0
    _
  %s4 = ssub.s32 1, %s2
  %s5 = scalar_select 0, %s4, %s2
  $region1: #{tpu_custom_call.1} parent=0
    #allocation2 [shape = 'u8[8192]{0}', space=vmem, size = 0x2000, scoped, tag = 'input window, operand 0, single buffered']
    #allocation3 [shape = 's32[1]{0}', space=sflag, size = 0x4, scoped, tag = 'scoped memory for tpu_custom_call.1']
    #allocation4 [shape = 's32[1]{0}', space=sflag, size = 0x4, scoped, tag = 'scoped memory for tpu_custom_call.1']
    #allocation5 [shape = 'u8[8192]{0}', space=vmem, size = 0x2000, scoped, tag = 'output window, operand 0, single buffered']
    %6 = vsyncpa [#allocation3], 0
    %7 = vsyncpa [#allocation4], 0
    // Predicated region
    $region2: #{tpu_custom_call.1} parent=1 // pred_check
      _
    $region3: #{tpu_custom_call.1} parent=1 // pred_check_branch
      %9 = sbr.rel (0) target = $region5
    $region4: #{tpu_custom_call.1} parent=1 // pred_region
      %s11 = ssub.s32 256, 256
      %12 = vsyncadd [#allocation3], %s11
      %s13 = sshll.u32 [#allocation2], 4
      %s14 = int_to_ptr.vmem [resolvable:$true] %s13
      %19 = dma.hbm_to_vmem [thread:$0]  %s0, 256, %s14, [#allocation3], 128, 128, 8
    $region5: #{tpu_custom_call.1} parent=1 // pred_fallthru
      _
    // Predicated region
    $region6: #{tpu_custom_call.1} parent=1 // pred_check
      _
    $region7: #{tpu_custom_call.1} parent=1 // pred_check_branch
      %21 = sbr.rel (0) target = $region9
    $region8: #{tpu_custom_call.1} parent=1 // pred_region
      %22 = dma.done [#allocation3], 256
    $region9: #{tpu_custom_call.1} parent=1 // pred_fallthru
      _
    %v23 = vld [vmem:[#allocation2] sm:$0xff]
    %v24 = vld [vmem:[#allocation2 + $0x8] sm:$0xff]
    %vm25 = vcmp.ge.f32.partialorder %v23, 0.0
    %vm26 = vcmp.ge.f32.partialorder %v24, 0.0
    %v27 = vsel %vm25, 1, 0
    %v28 = vsel %vm26, 1, 0
    %v29 = vcvt.s32.f32 %v27
    %v30 = vcvt.s32.f32 %v28
    %31 = vst [vmem:[#allocation5] sm:$0xff] %v29
    %32 = vst [vmem:[#allocation5 + $0x8] sm:$0xff] %v30
    // Predicated region
    $region10: #{tpu_custom_call.1} parent=1 // pred_check
      _
    $region11: #{tpu_custom_call.1} parent=1 // pred_check_branch
      %34 = sbr.rel (0) target = $region13
    $region12: #{tpu_custom_call.1} parent=1 // pred_region
      %s36 = ssub.s32 256, 256
      %37 = vsyncadd [#allocation4], %s36
      %s38 = sshll.u32 [#allocation5], 4
      %s39 = int_to_ptr.vmem [resolvable:$true] %s38
      %44 = dma.vmem_to_hbm [thread:$0]  %s39, 256, %s1, [#allocation4], 128, 128, 8
    $region13: #{tpu_custom_call.1} parent=1 // pred_fallthru
      _
    // Predicated region
    $region14: #{tpu_custom_call.1} parent=1 // pred_check
      _
    $region15: #{tpu_custom_call.1} parent=1 // pred_check_branch
      %46 = sbr.rel (0) target = $region17
    $region16: #{tpu_custom_call.1} parent=1 // pred_region
      %47 = dma.done [#allocation4], 256
    $region17: #{tpu_custom_call.1} parent=1 // pred_fallthru
      _
    %48 = vsyncpa [#allocation3], 1
    %49 = vsyncpa [#allocation4], 1

</llo_original>
